<compile_context>
chip_gen: v6e
topology: v6e:2x2x1
jax: 0.10.0
libtpu: 0.0.40
codegen_flags: <defaults>
</compile_context>

<pallas_src>
import jax
import jax.numpy as jnp
from jax import lax
from jax.experimental import pallas as pl
from jax.experimental.pallas import tpu as pltpu


# --------------------------------------------------------------------------- #
# Helpers
# --------------------------------------------------------------------------- #
def _round_up(x: int, m: int) -> int:
    return ((x + m - 1) // m) * m


def _cdiv(a: int, b: int) -> int:
    return (a + b - 1) // b


def _sublane(dtype) -> int:
    """Packed sublane count for the MXU input dtype (vreg packing)."""
    return {4: 8, 2: 16, 1: 32}.get(jnp.dtype(dtype).itemsize, 8)


def _pick_tile(padded_dim: int, lane: int, target: int, min_blocks: int = 1) -> int:
    """Pick a tile (multiple of `lane`) covering `padded_dim` with minimal
    padding waste, preferring sizes close to `target`, and yielding at least
    `min_blocks` blocks when that is achievable."""
    units = padded_dim // lane
    best_tile, best_score = None, None
    for nb in range(1, units + 1):
        if nb < min_blocks and units >= min_blocks:
            continue
        tile = _round_up(_cdiv(padded_dim, nb), lane)
        waste = tile * nb - padded_dim
        score = (waste, abs(tile - target))
        if best_score is None or score < best_score:
            best_tile, best_score = tile, score
    return best_tile


# --------------------------------------------------------------------------- #
# Kernel
# --------------------------------------------------------------------------- #
def _linear_relu_kernel(x_ref, w_ref, b_ref, o_ref, acc_ref):
    """One (tm, tn) output tile, accumulated over the K grid axis.

    x_ref:   (tm, tk)  activation tile
    w_ref:   (tn, tk)  weight tile in native [out_dim, in_dim] layout
    b_ref:   (1,  tn)  f32 bias tile
    o_ref:   (tm, tn)  output tile (written once, at the last K step)
    acc_ref: (tm, tn)  f32 VMEM accumulator scratch
    """
    k = pl.program_id(2)

    @pl.when(k == 0)
    def _init():
        acc_ref[...] = jnp.zeros_like(acc_ref)

    # Contract dim 1 of x with dim 1 of w -> (tm, tn). The MXU consumes the
    # transposed-B operand directly; no in-kernel transpose is materialized.
    acc_ref[...] += lax.dot_general(
        x_ref[...],
        w_ref[...],
        dimension_numbers=(((1,), (1,)), ((), ())),
        preferred_element_type=jnp.float32,
    )

    @pl.when(k == pl.num_programs(2) - 1)
    def _finalize():
        y = acc_ref[...] + b_ref[...]                       # bias added once, in f32
        o_ref[...] = jnp.maximum(y, 0.0).astype(o_ref.dtype)  # ReLU in f32, downcast


# --------------------------------------------------------------------------- #
# One-time parameter preparation (hoisted out of the forward hot path)
# --------------------------------------------------------------------------- #
def prepare_params(weight, bias, *, mxu_dtype=None, tn_target=512, tk_target=1024):
    """Prepare nn.Linear parameters once.

    weight: [out_dim, in_dim] (native PyTorch layout, NOT transposed)
    bias:   [out_dim]
    mxu_dtype: optional dtype for the MXU weight stream (e.g. jnp.bfloat16 /
               fp8 on v7x). Accumulation / bias / ReLU stay in f32.
    """
    N, K = weight.shape
    Np0 = _round_up(N, 128)
    Kp0 = _round_up(K, 128)

    # >=2 N blocks (when possible) so v7x's two TensorCores both get work.
    min_n_blocks = 2 if Np0 >= 256 else 1
    tn = _pick_tile(Np0, 128, tn_target, min_blocks=min_n_blocks)
    tk = _pick_tile(Kp0, 128, tk_target, min_blocks=1)
    Np = _round_up(Np0, tn)
    Kp = _round_up(Kp0, tk)

    if mxu_dtype is not None:
        weight = weight.astype(mxu_dtype)
    w_prepared = jnp.pad(weight, ((0, Np - N), (0, Kp - K)))          # stays [out, in]
    b_prepared = jnp.pad(bias.astype(jnp.float32), ((0, Np - N),)).reshape(1, Np)

    return dict(w=w_prepared, b=b_prepared, N=N, K=K, tn=tn, tk=tk,
                mxu_dtype=mxu_dtype)


# --------------------------------------------------------------------------- #
# Forward pass (hot path)
# --------------------------------------------------------------------------- #
def my_nn_block_apply(x, params, *, vmem_budget_bytes=36 * 1024 * 1024, tm_cap=2048):
    """y = ReLU(x @ W^T + b) using pre-prepared params (see prepare_params)."""
    w, b = params["w"], params["b"]
    N, K = params["N"], params["K"]
    tn, tk = params["tn"], params["tk"]
    mxu_dtype = params["mxu_dtype"]
    Np, Kp = w.shape

    lead = x.shape[:-1]
    assert x.shape[-1] == K, "in_dim mismatch between x and weight"
    out_dtype = x.dtype
    x2 = x.reshape(-1, K)
    B = x2.shape[0]

    if mxu_dtype is not None:
        x2 = x2.astype(mxu_dtype)

    in_item = jnp.dtype(x2.dtype).itemsize
    out_item = jnp.dtype(out_dtype).itemsize
    sub = _sublane(x2.dtype)
    Mp0 = _round_up(B, sub)

    def vmem_need(tm):
        return (2 * (tm * tk + tn * tk) * in_item   # double-buffered x / W tiles
                + 2 * tn * 4                        # double-buffered f32 bias tile
                + 2 * tm * tn * out_item            # double-buffered output tile
                + tm * tn * 4)                      # f32 accumulator scratch

    # Grow tm to cover the whole (padded) batch so the weight is streamed from
    # HBM exactly once; only split the M axis if the VMEM budget overflows.
    m_blocks = 1
    while True:
        tm = _round_up(_cdiv(Mp0, m_blocks), sub)
        if (tm <= tm_cap and vmem_need(tm) <= vmem_budget_bytes) or tm <= sub:
            break
        m_blocks += 1
    Mp = tm * m_blocks

    xp = x2
    if (Mp - B) or (Kp - K):
        xp = jnp.pad(x2, ((0, Mp - B), (0, Kp - K)))   # zeros: exact no-op for matmul

    grid = (m_blocks, Np // tn, Kp // tk)

    need = vmem_need(tm)
    vmem_limit = int(max(min(need * 3 // 2 + (2 << 20), 44 << 20), need + (2 << 20)))

    cost = pl.CostEstimate(
        flops=2 * Mp * Np * Kp,
        transcendentals=0,
        bytes_accessed=int(xp.nbytes + w.nbytes + b.nbytes + Mp * Np * out_item),
    )

    out = pl.pallas_call(
        _linear_relu_kernel,
        out_shape=jax.ShapeDtypeStruct((Mp, Np), out_dtype),
        grid_spec=pltpu.PrefetchScalarGridSpec(
            num_scalar_prefetch=0,
            grid=grid,
            in_specs=[
                pl.BlockSpec((tm, tk), lambda i, j, k: (i, k)),   # x
                pl.BlockSpec((tn, tk), lambda i, j, k: (j, k)),   # W (native [out, in])
                pl.BlockSpec((1, tn), lambda i, j, k: (0, j)),    # bias (f32)
            ],
            out_specs=pl.BlockSpec((tm, tn), lambda i, j, k: (i, j)),
            scratch_shapes=[pltpu.VMEM((tm, tn), jnp.float32)],
        ),
        compiler_params=pltpu.CompilerParams(
            dimension_semantics=("parallel", "parallel", "arbitrary"),
            vmem_limit_bytes=vmem_limit,
        ),
        cost_estimate=cost,
    )(xp, w, b)

    return out[:B, :N].reshape(*lead, N)


def my_nn_block(x, weight, bias, *, mxu_dtype=None, **apply_kwargs):
    """Convenience one-shot wrapper (prepare + apply). For repeated forward
    calls, call prepare_params() once and reuse the result."""
    params = prepare_params(weight, bias, mxu_dtype=mxu_dtype)
    return my_nn_block_apply(x, params, **apply_kwargs)


def _ref(x, weight, bias):
    return jnp.maximum(x @ weight.T + bias, 0.0)


# --------------------------------------------------------------------------- #
# Demo / self-test
# --------------------------------------------------------------------------- #
if __name__ == "__main__":
    key = jax.random.PRNGKey(0)

    # --- small shapes consistent with nn.Linear(in_dim, out_dim) -------------
    batch, in_dim, out_dim = 8, 32, 64
    kx, kw, kb = jax.random.split(key, 3)
    bound = 1.0 / (in_dim ** 0.5)
    x = jax.random.normal(kx, (batch, in_dim), dtype=jnp.float32)
    weight = jax.random.uniform(kw, (out_dim, in_dim), dtype=jnp.float32,
                                minval=-bound, maxval=bound)
    bias = jax.random.uniform(kb, (out_dim,), dtype=jnp.float32,
                              minval=-bound, maxval=bound)

    params = prepare_params(weight, bias)            # weight prep hoisted (done once)
    fwd = jax.jit(lambda xx: my_nn_block_apply(xx, params))
    y = jax.block_until_ready(fwd(x))
    assert y.shape == (batch, out_dim)
    assert jnp.allclose(y, _ref(x, weight, bias), atol=1e-5, rtol=1e-5)

    # --- larger, non-tile-aligned shapes: multi-tile grid + tight padding ----
    B2, K2, N2 = 300, 384, 640
    kx2, kw2, kb2 = jax.random.split(jax.random.PRNGKey(1), 3)
    bound2 = 1.0 / (K2 ** 0.5)
    x2 = jax.random.normal(kx2, (B2, K2), dtype=jnp.float32)
    w2 = jax.random.uniform(kw2, (N2, K2), dtype=jnp.float32,
                            minval=-bound2, maxval=bound2)
    b2 = jax.random.uniform(kb2, (N2,), dtype=jnp.float32,
                            minval=-bound2, maxval=bound2)

    params2 = prepare_params(w2, b2)
    y2 = jax.block_until_ready(jax.jit(lambda xx: my_nn_block_apply(xx, params2))(x2))
    assert y2.shape == (B2, N2)
    assert jnp.allclose(y2, _ref(x2, w2, b2), atol=1e-4, rtol=1e-4)

    # --- bf16 MXU-weight path (f32 accumulation), looser tolerance -----------
    params3 = prepare_params(w2, b2, mxu_dtype=jnp.bfloat16)
    y3 = jax.block_until_ready(jax.jit(lambda xx: my_nn_block_apply(xx, params3))(x2))
    assert y3.shape == (B2, N2)
    assert jnp.allclose(y3, _ref(x2, w2, b2), atol=5e-2, rtol=5e-2)

    print("KERNEL_OK")
</pallas_src>

<mosaic_0001>
module attributes {stable_mosaic.version = 11 : i64} {
  func.func @_linear_relu_kernel(%arg0: i32, %arg1: i32, %arg2: i32, %arg3: memref<8x128xf32, #tpu.memory_space<vmem>>, %arg4: memref<128x128xf32, #tpu.memory_space<vmem>>, %arg5: memref<1x128xf32, #tpu.memory_space<vmem>>, %arg6: memref<8x128xf32, #tpu.memory_space<vmem>>, %arg7: memref<8x128xf32, #tpu.memory_space<vmem>>) attributes {dimension_semantics = [#tpu.dimension_semantics<parallel>, #tpu.dimension_semantics<parallel>, #tpu.dimension_semantics<arbitrary>], iteration_bounds = array<i64: 1, 1, 1>, scalar_prefetch = 0 : i64, scratch_operands = 1 : i64, tpu.core_type = #tpu.core_type<tc>, window_params = [{transform_indices = @transform_0, window_bounds = array<i64: 8, 128>}, {transform_indices = @transform_1, window_bounds = array<i64: 128, 128>}, {transform_indices = @transform_2, window_bounds = array<i64: 1, 128>}, {transform_indices = @transform_3, window_bounds = array<i64: 8, 128>}]} {
    %c0_i32 = arith.constant 0 : i32
    %0 = arith.cmpi eq, %arg2, %c0_i32 : i32
    %1 = arith.extui %0 : i1 to i32
    %c0_i32_0 = arith.constant 0 : i32
    %2 = arith.cmpi ne, %1, %c0_i32_0 : i32
    scf.if %2 {
      %cst_10 = arith.constant 0.000000e+00 : f32
      %12 = vector.broadcast %cst_10 : f32 to vector<8x128xf32>
      %c0_11 = arith.constant 0 : index
      %c0_12 = arith.constant 0 : index
      %13 = vector.load %arg7[%c0_11, %c0_12] : memref<8x128xf32, #tpu.memory_space<vmem>>, vector<8x128xf32>
      tpu.vector_store %arg7[%c0_11, %c0_12], %12 {strides = array<i32>} : memref<8x128xf32, #tpu.memory_space<vmem>>, vector<8x128xf32>,
    } else {
    }
    %c0 = arith.constant 0 : index
    %c0_1 = arith.constant 0 : index
    %3 = vector.load %arg7[%c0, %c0_1] : memref<8x128xf32, #tpu.memory_space<vmem>>, vector<8x128xf32>
    %c0_2 = arith.constant 0 : index
    %c0_3 = arith.constant 0 : index
    %4 = vector.load %arg3[%c0_2, %c0_3] : memref<8x128xf32, #tpu.memory_space<vmem>>, vector<8x128xf32>
    %c0_4 = arith.constant 0 : index
    %c0_5 = arith.constant 0 : index
    %5 = vector.load %arg4[%c0_4, %c0_5] : memref<128x128xf32, #tpu.memory_space<vmem>>, vector<128x128xf32>
    %cst = arith.constant dense<0.000000e+00> : vector<8x128xf32>
    %6 = tpu.matmul %4, %5, %cst {dimension_numbers = #tpu.dot_dimension_numbers<[1], [1], [0], [0], [0, 0, 1, 0], [], []>} : vector<8x128xf32>, vector<128x128xf32>, vector<8x128xf32> -> vector<8x128xf32>
    %7 = arith.addf %3, %6 : vector<8x128xf32>
    %c0_6 = arith.constant 0 : index
    %c0_7 = arith.constant 0 : index
    %8 = vector.load %arg7[%c0_6, %c0_7] : memref<8x128xf32, #tpu.memory_space<vmem>>, vector<8x128xf32>
    tpu.vector_store %arg7[%c0_6, %c0_7], %7 {strides = array<i32>} : memref<8x128xf32, #tpu.memory_space<vmem>>, vector<8x128xf32>,
    %c0_i32_8 = arith.constant 0 : i32
    %9 = arith.cmpi eq, %arg2, %c0_i32_8 : i32
    %10 = arith.extui %9 : i1 to i32
    %c0_i32_9 = arith.constant 0 : i32
    %11 = arith.cmpi ne, %10, %c0_i32_9 : i32
    scf.if %11 {
      %c0_10 = arith.constant 0 : index
      %c0_11 = arith.constant 0 : index
      %12 = vector.load %arg7[%c0_10, %c0_11] : memref<8x128xf32, #tpu.memory_space<vmem>>, vector<8x128xf32>
      %c0_12 = arith.constant 0 : index
      %c0_13 = arith.constant 0 : index
      %13 = vector.load %arg5[%c0_12, %c0_13] : memref<1x128xf32, #tpu.memory_space<vmem>>, vector<1x128xf32>
      %14 = vector.broadcast %13 : vector<1x128xf32> to vector<8x128xf32>
      %15 = arith.addf %12, %14 : vector<8x128xf32>
      %cst_14 = arith.constant 0.000000e+00 : f32
      %16 = vector.broadcast %cst_14 : f32 to vector<8x128xf32>
      %17 = arith.maximumf %15, %16 : vector<8x128xf32>
      %c0_15 = arith.constant 0 : index
      %c0_16 = arith.constant 0 : index
      %18 = vector.load %arg6[%c0_15, %c0_16] : memref<8x128xf32, #tpu.memory_space<vmem>>, vector<8x128xf32>
      tpu.vector_store %arg6[%c0_15, %c0_16], %17 {strides = array<i32>} : memref<8x128xf32, #tpu.memory_space<vmem>>, vector<8x128xf32>,
    } else {
    }
    return
  }
  func.func @transform_0(%arg0: i32, %arg1: i32, %arg2: i32) -> (i32, i32) {
    %c0_i32 = arith.constant 0 : i32
    return %arg0, %arg2 : i32, i32
  }
  func.func @transform_1(%arg0: i32, %arg1: i32, %arg2: i32) -> (i32, i32) {
    %c0_i32 = arith.constant 0 : i32
    return %arg1, %arg2 : i32, i32
  }
  func.func @transform_2(%arg0: i32, %arg1: i32, %arg2: i32) -> (i32, i32) {
    %c0_i32 = arith.constant 0 : i32
    %c0_i32_0 = arith.constant 0 : i32
    return %c0_i32, %arg1 : i32, i32
  }
  func.func @transform_3(%arg0: i32, %arg1: i32, %arg2: i32) -> (i32, i32) {
    %c0_i32 = arith.constant 0 : i32
    return %arg0, %arg1 : i32, i32
  }
}

</mosaic_0001>

<llo_original>
// kernel: _lambda_.1
$region0: #{_lambda_.1}
  #allocation0 [shape = 'u32[]', space=smem, size = 0x4, offset = 0x4, fixed_abs, tag = 'smem constant byte address 0x4 - core index']
  #allocation1 [shape = 'u32[144,128]{1,0:T(1,128)}', space=vmem, size = 0x12000, scoped, tag = 'internal scratch']
  #allocation2 [shape = 'f32[8,128]{1,0:T(8,128)}', space=vmem, size = 0x1000, scoped, tag = 'scratch operand']
  %s0 = inlined_call_operand.vmem [shape: f32[8,128], index: 0, kind: input, shape index: {}]
  %s1 = inlined_call_operand.hbm [shape: f32[128,128], index: 1, kind: input, shape index: {}]
  %s2 = inlined_call_operand.vmem [shape: f32[1,128], index: 2, kind: input, shape index: {}]
  %s3 = inlined_call_operand.hbm [shape: f32[8,128], index: 3, kind: output, shape index: {}]
  %s4 = sld [smem:[#allocation0]]
  $region34: #{_lambda_.1} parent=0
    _
  %s6 = ssub.s32 1, %s4
  %s7 = scalar_select 0, %s6, %s4
  $region1: #{_lambda_.1} parent=0
    #allocation3 [shape = 'u8[65536]{0}', space=vmem, size = 0x10000, scoped, tag = 'input window, operand 1, single buffered']
    #allocation4 [shape = 's32[1]{0}', space=sflag, size = 0x4, scoped, tag = 'scoped memory for _lambda_.1']
    #allocation5 [shape = 's32[1]{0}', space=sflag, size = 0x4, scoped, tag = 'scoped memory for _lambda_.1']
    #allocation6 [shape = 'u8[4096]{0}', space=vmem, size = 0x1000, scoped, tag = 'output window, operand 0, single buffered']
    %8 = vsyncpa [#allocation4], 0
    %9 = vsyncpa [#allocation5], 0
    // Predicated region
    $region2: #{_lambda_.1} parent=1 // pred_check
      _
    $region3: #{_lambda_.1} parent=1 // pred_check_branch
      %11 = sbr.rel (0) target = $region5
    $region4: #{_lambda_.1} parent=1 // pred_region
      _
    $region5: #{_lambda_.1} parent=1 // pred_fallthru
      _
    // Predicated region
    $region6: #{_lambda_.1} parent=1 // pred_check
      _
    $region7: #{_lambda_.1} parent=1 // pred_check_branch
      %13 = sbr.rel (0) target = $region9
    $region8: #{_lambda_.1} parent=1 // pred_region
      %s15 = ssub.s32 2048, 2048
      %16 = vsyncadd [#allocation4], %s15
      %s17 = sshll.u32 [#allocation3], 4
      %s18 = int_to_ptr.vmem [resolvable:$true] %s17
      %23 = dma.hbm_to_vmem [thread:$0]  %s1, 2048, %s18, [#allocation4], 128, 128, 8
    $region9: #{_lambda_.1} parent=1 // pred_fallthru
      _
    // Predicated region
    $region10: #{_lambda_.1} parent=1 // pred_check
      _
    $region11: #{_lambda_.1} parent=1 // pred_check_branch
      %25 = sbr.rel (0) target = $region13
    $region12: #{_lambda_.1} parent=1 // pred_region
      _
    $region13: #{_lambda_.1} parent=1 // pred_fallthru
      _
    // Predicated region
    $region14: #{_lambda_.1} parent=1 // pred_check
      _
    $region15: #{_lambda_.1} parent=1 // pred_check_branch
      %27 = sbr.rel (0) target = $region17
    $region16: #{_lambda_.1} parent=1 // pred_region
      %28 = dma.done [#allocation4], 2048
    $region17: #{_lambda_.1} parent=1 // pred_fallthru
      _
    %p29 = scmp.eq.s32.totalorder 0, 0
    // Predicated region
    $region18: #{_lambda_.1} parent=1 // pred_check
      %p30 = pneg %p29
    $region19: #{_lambda_.1} parent=1 // pred_check_branch
      %32 = sbr.rel (%p30) target = $region21
    $region20: #{_lambda_.1} parent=1 // pred_region
      %33 = vst [vmem:[#allocation2] sm:$0xff] 0.0
    $region21: #{_lambda_.1} parent=1 // pred_fallthru
      _
    %v34 = vld [vmem:[#allocation2] sm:$0xff]
    %v35 = vld [vmem:[%s0] sm:$0xff]
    %v36 = vld [vmem:[#allocation3] sm:$0xff]
    %v37 = vld [vmem:[#allocation3 + $0x8] sm:$0xff]
    %v38 = vld [vmem:[#allocation3 + $0x10] sm:$0xff]
    %v39 = vld [vmem:[#allocation3 + $0x18] sm:$0xff]
    %v40 = vld [vmem:[#allocation3 + $0x20] sm:$0xff]
    %v41 = vld [vmem:[#allocation3 + $0x28] sm:$0xff]
    %v42 = vld [vmem:[#allocation3 + $0x30] sm:$0xff]
    %v43 = vld [vmem:[#allocation3 + $0x38] sm:$0xff]
    %v44 = vld [vmem:[#allocation3 + $0x40] sm:$0xff]
    %v45 = vld [vmem:[#allocation3 + $0x48] sm:$0xff]
    %v46 = vld [vmem:[#allocation3 + $0x50] sm:$0xff]
    %v47 = vld [vmem:[#allocation3 + $0x58] sm:$0xff]
    %v48 = vld [vmem:[#allocation3 + $0x60] sm:$0xff]
    %v49 = vld [vmem:[#allocation3 + $0x68] sm:$0xff]
    %v50 = vld [vmem:[#allocation3 + $0x70] sm:$0xff]
    %v51 = vld [vmem:[#allocation3 + $0x78] sm:$0xff]
    %52 = vmatprep.subr.mxu0 0.0
    %53 = vmatpush1.xpose.msra.mxu0 %v51
    %54 = vmatprep.subr.mxu0 0.0
    %55 = vmatpush1.xpose.msra.mxu0 %v50
    %56 = vmatprep.subr.mxu0 0.0
    %57 = vmatpush1.xpose.msra.mxu0 %v49
    %58 = vmatprep.subr.mxu0 0.0
    %59 = vmatpush1.xpose.msra.mxu0 %v48
    %60 = vmatprep.subr.mxu0 0.0
    %61 = vmatpush1.xpose.msra.mxu0 %v47
    %62 = vmatprep.subr.mxu0 0.0
    %63 = vmatpush1.xpose.msra.mxu0 %v46
    %64 = vmatprep.subr.mxu0 0.0
    %65 = vmatpush1.xpose.msra.mxu0 %v45
    %66 = vmatprep.subr.mxu0 0.0
    %67 = vmatpush1.xpose.msra.mxu0 %v44
    %68 = vmatprep.subr.mxu0 0.0
    %69 = vmatpush1.xpose.msra.mxu0 %v43
    %70 = vmatprep.subr.mxu0 0.0
    %71 = vmatpush1.xpose.msra.mxu0 %v42
    %72 = vmatprep.subr.mxu0 0.0
    %73 = vmatpush1.xpose.msra.mxu0 %v41
    %74 = vmatprep.subr.mxu0 0.0
    %75 = vmatpush1.xpose.msra.mxu0 %v40
    %76 = vmatprep.subr.mxu0 0.0
    %77 = vmatpush1.xpose.msra.mxu0 %v39
    %78 = vmatprep.subr.mxu0 0.0
    %79 = vmatpush1.xpose.msra.mxu0 %v38
    %80 = vmatprep.subr.mxu0 0.0
    %81 = vmatpush1.xpose.msra.mxu0 %v37
    %82 = vmatprep.subr.mxu0 0.0
    %83 = vmatpush1.xpose.msra.mxu0 %v36
    %84 = vmatprep.subr.mxu0 0.0
    %85 = vmatpush2.xpose.msra.mxu0 0.0
    %86 = vmatprep.subr.mxu0 0.0
    %87 = vmatpush2.xpose.msra.mxu0 0.0
    %88 = vmatprep.subr.mxu0 0.0
    %89 = vmatpush2.xpose.msra.mxu0 0.0
    %90 = vmatprep.subr.mxu0 0.0
    %91 = vmatpush2.xpose.msra.mxu0 0.0
    %92 = vmatprep.subr.mxu0 0.0
    %93 = vmatpush2.xpose.msra.mxu0 0.0
    %94 = vmatprep.subr.mxu0 0.0
    %95 = vmatpush2.xpose.msra.mxu0 0.0
    %96 = vmatprep.subr.mxu0 0.0
    %97 = vmatpush2.xpose.msra.mxu0 0.0
    %98 = vmatprep.subr.mxu0 0.0
    %99 = vmatpush2.xpose.msra.mxu0 0.0
    %100 = vmatprep.subr.mxu0 0.0
    %101 = vmatpush2.xpose.msra.mxu0 0.0
    %102 = vmatprep.subr.mxu0 0.0
    %103 = vmatpush2.xpose.msra.mxu0 0.0
    %104 = vmatprep.subr.mxu0 0.0
    %105 = vmatpush2.xpose.msra.mxu0 0.0
    %106 = vmatprep.subr.mxu0 0.0
    %107 = vmatpush2.xpose.msra.mxu0 0.0
    %108 = vmatprep.subr.mxu0 0.0
    %109 = vmatpush2.xpose.msra.mxu0 0.0
    %110 = vmatprep.subr.mxu0 0.0
    %111 = vmatpush2.xpose.msra.mxu0 0.0
    %112 = vmatprep.subr.mxu0 0.0
    %113 = vmatpush2.xpose.msra.mxu0 0.0
    %114 = vmatprep.subr.mxu0 0.0
    %115 = vmatpush2.xpose.msra.mxu0 0.0
    %116 = vmatprep.mubr.f32.mxu0 0.0
    %117 = vmatmul.mubr.f32.gmra.mxu0 %v35
    %v118 = vpop.f32.mrf.mxu0
    %v119 = vadd.f32 0.0, %v118
    %v120 = vpop.f32.mrf.mxu0
    %121 = vdwg.mxu0
    %v122 = vadd.f32 %v34, %v119
    %123 = vst [vmem:[#allocation2] sm:$0xff] %v122
    // Predicated region
    $region22: #{_lambda_.1} parent=1 // pred_check
      %p124 = pneg %p29
    $region23: #{_lambda_.1} parent=1 // pred_check_branch
      %126 = sbr.rel (%p124) target = $region25
    $region24: #{_lambda_.1} parent=1 // pred_region
      %v127 = vld [vmem:[#allocation2] sm:$0xff]
      %v128 = vld [vmem:[%s2] sm:$0x1]
      %v130 = vlaneseq
      %v131 = vshrl.u32 %v130, 7
      %v132 = vsub.s32 0, %v131
      %v133 = vrot.slane %v128, %v132
      %v135 = vadd.f32 %v127, %v133
      %v136 = vmax.f32 %v135, 0.0
      %137 = vst [vmem:[#allocation6] sm:$0xff] %v136
    $region25: #{_lambda_.1} parent=1 // pred_fallthru
      _
    // Predicated region
    $region26: #{_lambda_.1} parent=1 // pred_check
      _
    $region27: #{_lambda_.1} parent=1 // pred_check_branch
      %139 = sbr.rel (0) target = $region29
    $region28: #{_lambda_.1} parent=1 // pred_region
      %s141 = ssub.s32 128, 128
      %142 = vsyncadd [#allocation5], %s141
      %s144 = sshll.u32 [#allocation6], 4
      %s145 = int_to_ptr.vmem [resolvable:$true] %s144
      %147 = dma.vmem_to_hbm [thread:$0]  %s145, 128, %s3, [#allocation5]
    $region29: #{_lambda_.1} parent=1 // pred_fallthru
      _
    // Predicated region
    $region30: #{_lambda_.1} parent=1 // pred_check
      _
    $region31: #{_lambda_.1} parent=1 // pred_check_branch
      %149 = sbr.rel (0) target = $region33
    $region32: #{_lambda_.1} parent=1 // pred_region
      %150 = dma.done [#allocation5], 128
    $region33: #{_lambda_.1} parent=1 // pred_fallthru
      _
    %151 = vsyncpa [#allocation4], 1
    %152 = vsyncpa [#allocation5], 1

</llo_original>
